<compile_context>
chip_gen: v7x
topology: tpu7x:2x2x1
jax: 0.10.0
libtpu: 0.0.40
codegen_flags: <defaults>
</compile_context>

<pallas_src>
import jax
import jax.numpy as jnp
from jax.experimental import pallas as pl
from jax.experimental.pallas import tpu as pltpu


def _round_up(x, m):
    return ((x + m - 1) // m) * m


def _text_processor_kernel(x_ref, wT_ref, params_ref, o_ref):
    # x:      [TB, llm_dim]   f32   (native input layout, batch tile on sublanes)
    # wT:     [d_ff, llm_dim] bf16  (== torch Linear.weight layout, resident)
    # params: [d_ff, 3]       f32   (columns: bias, gamma, beta, resident)
    # o:      [d_ff, TB]      f32   (batch tile on the lane axis -> unmasked vst)
    bias = params_ref[:, 0:1]   # [d_ff, 1]
    gamma = params_ref[:, 1:2]  # [d_ff, 1]
    beta = params_ref[:, 2:3]   # [d_ff, 1]

    # Linear: contract over llm_dim (dim 1 of both operands) -> [d_ff, TB].
    # bf16 MXU operands, f32 accumulation; LayerNorm renormalizes afterwards.
    x = x_ref[...].astype(jnp.bfloat16)
    h = jax.lax.dot_general(
        wT_ref[...], x,
        dimension_numbers=(((1,), (1,)), ((), ())),
        preferred_element_type=jnp.float32,
    ) + bias                                                   # [d_ff, TB]

    # LayerNorm over d_ff (axis 0, sublane/XLU reduce); biased variance, eps=1e-5.
    mean = jnp.mean(h, axis=0, keepdims=True)                  # [1, TB]
    centered = h - mean
    var = jnp.mean(centered * centered, axis=0, keepdims=True)
    inv = jax.lax.rsqrt(var + 1e-5)                            # [1, TB]
    hn = centered * (gamma * inv) + beta                       # gamma folded into scale

    # GELU — exact erf formulation (PyTorch nn.GELU default); mul by 1/sqrt(2).
    out = 0.5 * hn * (1.0 + jax.lax.erf(hn * 0.7071067811865476))

    o_ref[...] = out.astype(o_ref.dtype)


def text_processor(text_embeddings, weight, bias, gamma, beta, *, batch_tile=4096):
    """Fused Linear -> LayerNorm -> GELU.

    Args:
      text_embeddings: [B, llm_dim] float32
      weight:          [d_ff, llm_dim] float32  (torch Linear.weight layout)
      bias:            [d_ff] float32
      gamma, beta:     [d_ff] float32 (LayerNorm affine)
    Returns:
      text_features:   [B, d_ff] float32
    """
    x = text_embeddings.astype(jnp.float32)
    B, llm_dim = x.shape
    d_ff = weight.shape[0]

    # ---- Batch tile selection (VMEM-budget derived, multiple of 128 lanes) ----
    # Per grid step: double-buffered input tile (TB*llm_dim*4) + double-buffered
    # output tile (TB*d_ff*4); weight/params are resident and tiny.  Keep the
    # pipelined footprint under ~26 MiB so a 32 MiB vmem limit is safe on
    # v5e (128 MiB phys), v6e (128 MiB phys) and v7x (64 MiB phys).
    vmem_budget = 26 << 20
    per_col_bytes = 2 * llm_dim * 4 + 2 * d_ff * 4
    tb_cap = max(128, (vmem_budget // per_col_bytes) // 128 * 128)

    TB = min(_round_up(batch_tile, 128), tb_cap, _round_up(B, 128))
    n_tiles = pl.cdiv(B, TB)
    # v7x megacore: if the whole batch collapses into one tile but B > 128,
    # split into >= 2 tiles so the "parallel" axis feeds both TensorCores.
    if n_tiles < 2 and B > 128:
        TB = max(128, _round_up(pl.cdiv(B, 2), 128))
        n_tiles = pl.cdiv(B, TB)
    B_pad = n_tiles * TB
    grid = (n_tiles,)

    # Resident operands: bf16 weight, packed LN params (one DMA instead of three).
    wT = weight.astype(jnp.bfloat16)                                   # [d_ff, llm_dim]
    params = jnp.stack(
        [bias.astype(jnp.float32), gamma.astype(jnp.float32), beta.astype(jnp.float32)],
        axis=-1,
    )                                                                  # [d_ff, 3]

    cost = pl.CostEstimate(
        flops=int(2 * B_pad * llm_dim * d_ff + 10 * B_pad * d_ff),
        transcendentals=int(B_pad * d_ff + B_pad),
        bytes_accessed=int(B * llm_dim * 4 + wT.size * 2 + params.size * 4
                           + d_ff * B_pad * 4),
    )

    out_t = pl.pallas_call(
        _text_processor_kernel,
        out_shape=jax.ShapeDtypeStruct((d_ff, B_pad), jnp.float32),
        grid_spec=pltpu.PrefetchScalarGridSpec(
            num_scalar_prefetch=0,
            grid=grid,
            in_specs=[
                pl.BlockSpec((TB, llm_dim), lambda i: (i, 0)),     # x streamed natively
                pl.BlockSpec((d_ff, llm_dim), lambda i: (0, 0)),   # resident weight
                pl.BlockSpec((d_ff, 3), lambda i: (0, 0)),         # resident LN params
            ],
            out_specs=pl.BlockSpec((d_ff, TB), lambda i: (0, i)),  # lane-dense output
        ),
        compiler_params=pltpu.CompilerParams(
            dimension_semantics=("parallel",),    # v7x: shard batch tiles over 2 TCs
            vmem_limit_bytes=32 << 20,            # raise v5e's 16 MiB scoped default
        ),
        cost_estimate=cost,
    )(x, wT, params)

    # [d_ff, B_pad] -> [B, d_ff]; tiny output pass, keeps the module's layout.
    return jnp.transpose(out_t[:, :B])


class TextEncoderPallas:
    """JAX/Pallas re-implementation of TextEncoder's numeric forward path."""

    def __init__(self, config, key):
        self.llm_dim = config["llm_dim"]
        self.d_ff = config.get("d_ff", 32)

        k_w, k_b = jax.random.split(key)
        # nn.Linear default init: uniform +/- 1/sqrt(fan_in).
        bound = 1.0 / jnp.sqrt(jnp.float32(self.llm_dim))
        # Stored in torch Linear.weight layout [d_ff, llm_dim].
        self.weight = jax.random.uniform(
            k_w, (self.d_ff, self.llm_dim), jnp.float32, -bound, bound
        )
        self.bias = jax.random.uniform(k_b, (self.d_ff,), jnp.float32, -bound, bound)
        # LayerNorm default affine init.
        self.gamma = jnp.ones((self.d_ff,), jnp.float32)
        self.beta = jnp.zeros((self.d_ff,), jnp.float32)

    # TODO(synk): prompt generation / tokenizer / pretrained BERT embedding stages
    # operate on Python strings and an external LLM; no Pallas equivalent.  We
    # reproduce the module's documented fallback (random embeddings * 0.1).
    def get_text_embeddings_fallback(self, batch_size, key):
        return jax.random.normal(key, (batch_size, self.llm_dim), jnp.float32) * 0.1

    def get_text_features(self, text_embeddings):
        return text_processor(
            text_embeddings, self.weight, self.bias, self.gamma, self.beta
        )

    def forward(self, text_embeddings=None, batch_size=None, key=None):
        if text_embeddings is None:
            assert batch_size is not None and key is not None
            text_embeddings = self.get_text_embeddings_fallback(batch_size, key)
        text_features = self.get_text_features(text_embeddings)
        return text_features, text_embeddings


def _reference_text_processor(x, w, b, gamma, beta):
    """Pure-JAX reference (same bf16-matmul / f32-accumulate precision as kernel)."""
    h = jnp.dot(
        x.astype(jnp.bfloat16),
        jnp.transpose(w).astype(jnp.bfloat16),
        preferred_element_type=jnp.float32,
    ) + b
    mean = jnp.mean(h, axis=-1, keepdims=True)
    var = jnp.mean((h - mean) ** 2, axis=-1, keepdims=True)
    hn = (h - mean) * jax.lax.rsqrt(var + 1e-5)
    hn = hn * gamma + beta
    return jax.nn.gelu(hn, approximate=False)


if __name__ == "__main__":
    config = {
        "llm_dim": 64,     # small stand-in for e.g. BERT's 768
        "d_ff": 32,
        "num_nodes": 16,
        "llm_model": "bert-base-uncased",  # unused (no model load)
        "horizon": 12,
        "top_k": 5,
    }
    batch = 8

    root = jax.random.PRNGKey(0)
    k_params, k_emb = jax.random.split(root)

    encoder = TextEncoderPallas(config, k_params)

    # Entry point: text_embeddings (the module's fallback-generated embeddings).
    text_embeddings = encoder.get_text_embeddings_fallback(batch, k_emb)

    text_features, text_embeddings = encoder.forward(text_embeddings=text_embeddings)
    text_features = jax.block_until_ready(text_features)

    # Sanity check against pure-JAX reference (same matmul precision).
    ref = _reference_text_processor(
        text_embeddings, encoder.weight, encoder.bias, encoder.gamma, encoder.beta
    )
    assert text_features.shape == (batch, config["d_ff"])
    max_err = float(jnp.max(jnp.abs(text_features - ref)))
    assert jnp.allclose(text_features, ref, atol=1e-4, rtol=1e-4), max_err

    print("KERNEL_OK")
</pallas_src>

<mosaic_0001>
module attributes {stable_mosaic.version = 11 : i64} {
  func.func @_text_processor_kernel(%arg0: i32, %arg1: memref<128x64xf32, #tpu.memory_space<vmem>>, %arg2: memref<32x64xbf16, #tpu.memory_space<vmem>>, %arg3: memref<32x3xf32, #tpu.memory_space<vmem>>, %arg4: memref<32x128xf32, #tpu.memory_space<vmem>>) attributes {dimension_semantics = [#tpu.dimension_semantics<parallel>], iteration_bounds = array<i64: 1>, scalar_prefetch = 0 : i64, scratch_operands = 0 : i64, tpu.core_type = #tpu.core_type<tc>, window_params = [{transform_indices = @transform_0, window_bounds = array<i64: 128, 64>}, {pipeline_mode = #tpu.pipeline_mode<synchronous>, transform_indices = @transform_1, window_bounds = array<i64: 32, 64>}, {pipeline_mode = #tpu.pipeline_mode<synchronous>, transform_indices = @transform_2, window_bounds = array<i64: 32, 3>}, {transform_indices = @transform_3, window_bounds = array<i64: 32, 128>}]} {
    %c0 = arith.constant 0 : index
    %c0_0 = arith.constant 0 : index
    %0 = vector.load %arg3[%c0, %c0_0] : memref<32x3xf32, #tpu.memory_space<vmem>>, vector<32x1xf32>
    %c0_1 = arith.constant 0 : index
    %c1 = arith.constant 1 : index
    %1 = vector.load %arg3[%c0_1, %c1] : memref<32x3xf32, #tpu.memory_space<vmem>>, vector<32x1xf32>
    %c0_2 = arith.constant 0 : index
    %c2 = arith.constant 2 : index
    %2 = vector.load %arg3[%c0_2, %c2] : memref<32x3xf32, #tpu.memory_space<vmem>>, vector<32x1xf32>
    %c0_3 = arith.constant 0 : index
    %c0_4 = arith.constant 0 : index
    %3 = vector.load %arg1[%c0_3, %c0_4] : memref<128x64xf32, #tpu.memory_space<vmem>>, vector<128x64xf32>
    %4 = arith.truncf %3 : vector<128x64xf32> to vector<128x64xbf16>
    %c0_5 = arith.constant 0 : index
    %c0_6 = arith.constant 0 : index
    %5 = vector.load %arg2[%c0_5, %c0_6] : memref<32x64xbf16, #tpu.memory_space<vmem>>, vector<32x64xbf16>
    %cst = arith.constant dense<0.000000e+00> : vector<32x128xf32>
    %6 = tpu.matmul %5, %4, %cst {dimension_numbers = #tpu.dot_dimension_numbers<[1], [1], [0], [0], [0, 0, 1, 0], [], []>} : vector<32x64xbf16>, vector<128x64xbf16>, vector<32x128xf32> -> vector<32x128xf32>
    %7 = vector.broadcast %0 : vector<32x1xf32> to vector<32x128xf32>
    %8 = arith.addf %6, %7 : vector<32x128xf32>
    %cst_7 = arith.constant dense<0.000000e+00> : vector<128xf32>
    %9 = vector.multi_reduction <add>, %8, %cst_7 [0] : vector<32x128xf32> to vector<128xf32>
    %10 = vector.shape_cast %9 : vector<128xf32> to vector<1x128xf32>
    %cst_8 = arith.constant 3.200000e+01 : f32
    %11 = vector.broadcast %cst_8 : f32 to vector<1x128xf32>
    %12 = arith.divf %10, %11 : vector<1x128xf32>
    %13 = vector.broadcast %12 : vector<1x128xf32> to vector<32x128xf32>
    %14 = arith.subf %8, %13 : vector<32x128xf32>
    %15 = arith.mulf %14, %14 : vector<32x128xf32>
    %cst_9 = arith.constant dense<0.000000e+00> : vector<128xf32>
    %16 = vector.multi_reduction <add>, %15, %cst_9 [0] : vector<32x128xf32> to vector<128xf32>
    %17 = vector.shape_cast %16 : vector<128xf32> to vector<1x128xf32>
    %cst_10 = arith.constant 3.200000e+01 : f32
    %18 = vector.broadcast %cst_10 : f32 to vector<1x128xf32>
    %19 = arith.divf %17, %18 : vector<1x128xf32>
    %cst_11 = arith.constant 9.99999974E-6 : f32
    %20 = vector.broadcast %cst_11 : f32 to vector<1x128xf32>
    %21 = arith.addf %19, %20 : vector<1x128xf32>
    %22 = math.rsqrt %21 : vector<1x128xf32>
    %23 = vector.broadcast %1 : vector<32x1xf32> to vector<32x128xf32>
    %24 = vector.broadcast %22 : vector<1x128xf32> to vector<32x128xf32>
    %25 = arith.mulf %23, %24 : vector<32x128xf32>
    %26 = arith.mulf %14, %25 : vector<32x128xf32>
    %27 = vector.broadcast %2 : vector<32x1xf32> to vector<32x128xf32>
    %28 = arith.addf %26, %27 : vector<32x128xf32>
    %cst_12 = arith.constant 5.000000e-01 : f32
    %29 = vector.broadcast %cst_12 : f32 to vector<32x128xf32>
    %30 = arith.mulf %29, %28 : vector<32x128xf32>
    %cst_13 = arith.constant 0.707106769 : f32
    %31 = vector.broadcast %cst_13 : f32 to vector<32x128xf32>
    %32 = arith.mulf %28, %31 : vector<32x128xf32>
    %33 = math.erf %32 : vector<32x128xf32>
    %cst_14 = arith.constant 1.000000e+00 : f32
    %34 = vector.broadcast %cst_14 : f32 to vector<32x128xf32>
    %35 = arith.addf %34, %33 : vector<32x128xf32>
    %36 = arith.mulf %30, %35 : vector<32x128xf32>
    %c0_15 = arith.constant 0 : index
    %c0_16 = arith.constant 0 : index
    %37 = vector.load %arg4[%c0_15, %c0_16] : memref<32x128xf32, #tpu.memory_space<vmem>>, vector<32x128xf32>
    tpu.vector_store %arg4[%c0_15, %c0_16], %36 {strides = array<i32>} : memref<32x128xf32, #tpu.memory_space<vmem>>, vector<32x128xf32>,
    return
  }
  func.func @transform_0(%arg0: i32) -> (i32, i32) {
    %c0_i32 = arith.constant 0 : i32
    %c0_i32_0 = arith.constant 0 : i32
    return %arg0, %c0_i32 : i32, i32
  }
  func.func @transform_1(%arg0: i32) -> (i32, i32) {
    %c0_i32 = arith.constant 0 : i32
    %c0_i32_0 = arith.constant 0 : i32
    %c0_i32_1 = arith.constant 0 : i32
    return %c0_i32, %c0_i32_0 : i32, i32
  }
  func.func @transform_2(%arg0: i32) -> (i32, i32) {
    %c0_i32 = arith.constant 0 : i32
    %c0_i32_0 = arith.constant 0 : i32
    %c0_i32_1 = arith.constant 0 : i32
    return %c0_i32, %c0_i32_0 : i32, i32
  }
  func.func @transform_3(%arg0: i32) -> (i32, i32) {
    %c0_i32 = arith.constant 0 : i32
    %c0_i32_0 = arith.constant 0 : i32
    return %c0_i32, %arg0 : i32, i32
  }
}

</mosaic_0001>

<llo_original>
// kernel: tpu_custom_call.1
$region0: #{tpu_custom_call.1}
  #allocation0 [shape = 'u32[]', space=smem, size = 0x4, offset = 0x4, fixed_abs, tag = 'smem constant byte address 0x4 - core index']
  #allocation1 [shape = 'u32[144,128]{1,0:T(1,128)}', space=vmem, size = 0x12000, scoped, tag = 'internal scratch']
  %s0 = inlined_call_operand.vmem [shape: f32[8,64], index: 0, kind: input, shape index: {}]
  %s1 = inlined_call_operand.vmem [shape: bf16[32,64], index: 1, kind: input, shape index: {}]
  %s2 = inlined_call_operand.vmem [shape: f32[32,3], index: 2, kind: input, shape index: {}]
  %s3 = inlined_call_operand.hbm [shape: f32[32,128], index: 3, kind: output, shape index: {}]
  %s4 = sld [smem:[#allocation0]]
  $region22: #{tpu_custom_call.1} parent=0
    _
  %s6 = ssub.s32 1, %s4
  %s7 = scalar_select 0, %s6, %s4
  $region1: #{tpu_custom_call.1} parent=0
    #allocation2 [shape = 'u8[16384]{0}', space=vmem, size = 0x4000, scoped, tag = 'output window, operand 0, single buffered']
    #allocation3 [shape = 's32[1]{0}', space=sflag, size = 0x4, scoped, tag = 'scoped memory for tpu_custom_call.1']
    %8 = vsyncpa [#allocation3], 0
    // Predicated region
    $region2: #{tpu_custom_call.1} parent=1 // pred_check
      _
    $region3: #{tpu_custom_call.1} parent=1 // pred_check_branch
      %10 = sbr.rel (0) target = $region5
    $region4: #{tpu_custom_call.1} parent=1 // pred_region
      _
    $region5: #{tpu_custom_call.1} parent=1 // pred_fallthru
      _
    // Predicated region
    $region6: #{tpu_custom_call.1} parent=1 // pred_check
      _
    $region7: #{tpu_custom_call.1} parent=1 // pred_check_branch
      %12 = sbr.rel (0) target = $region9
    $region8: #{tpu_custom_call.1} parent=1 // pred_region
      _
    $region9: #{tpu_custom_call.1} parent=1 // pred_fallthru
      _
    // Predicated region
    $region10: #{tpu_custom_call.1} parent=1 // pred_check
      _
    $region11: #{tpu_custom_call.1} parent=1 // pred_check_branch
      %14 = sbr.rel (0) target = $region13
    $region12: #{tpu_custom_call.1} parent=1 // pred_region
      _
    $region13: #{tpu_custom_call.1} parent=1 // pred_fallthru
      _
    %v16 = vld [vmem:[%s2] sm:$0xff]
    %v17 = vld [vmem:[%s2 + $0x8] sm:$0xff]
    %v18 = vld [vmem:[%s2 + $0x10] sm:$0xff]
    %v19 = vld [vmem:[%s2 + $0x18] sm:$0xff]
    %v20 = vld [vmem:[%s0] sm:$0xff]
    %v21 = vld [vmem:[%s0 + $0x8] sm:$0xff]
    %v22 = vld [vmem:[%s0 + $0x10] sm:$0xff]
    %v23 = vld [vmem:[%s0 + $0x18] sm:$0xff]
    %v24 = vld [vmem:[%s0 + $0x20] sm:$0xff]
    %v25 = vld [vmem:[%s0 + $0x28] sm:$0xff]
    %v26 = vld [vmem:[%s0 + $0x30] sm:$0xff]
    %v27 = vld [vmem:[%s0 + $0x38] sm:$0xff]
    %v28 = vld [vmem:[%s0 + $0x40] sm:$0xff]
    %v29 = vld [vmem:[%s0 + $0x48] sm:$0xff]
    %v30 = vld [vmem:[%s0 + $0x50] sm:$0xff]
    %v31 = vld [vmem:[%s0 + $0x58] sm:$0xff]
    %v32 = vld [vmem:[%s0 + $0x60] sm:$0xff]
    %v33 = vld [vmem:[%s0 + $0x68] sm:$0xff]
    %v34 = vld [vmem:[%s0 + $0x70] sm:$0xff]
    %v35 = vld [vmem:[%s0 + $0x78] sm:$0xff]
    %v36 = vpack.c.bf16 %v21, %v20
    %v37 = vpack.c.bf16 %v23, %v22
    %v38 = vpack.c.bf16 %v25, %v24
    %v39 = vpack.c.bf16 %v27, %v26
    %v40 = vpack.c.bf16 %v29, %v28
    %v41 = vpack.c.bf16 %v31, %v30
    %v42 = vpack.c.bf16 %v33, %v32
    %v43 = vpack.c.bf16 %v35, %v34
    %v44 = vld [vmem:[%s1] sm:$0xf]
    %v45 = vld [vmem:[%s1 + $0x4] sm:$0xf]
    %v46 = vld [vmem:[%s1 + $0x8] sm:$0xf]
    %v47 = vld [vmem:[%s1 + $0xc] sm:$0xf]
    %49 = vset.pattern.permute.xlu0 0
    %50 = vperm.xlu0 %49, %v16
    %v51 = vpop.permute.xlu0 %50
    %54 = vset.pattern.permute.xlu0 0
    %55 = vperm.xlu0 %54, %v17
    %v56 = vpop.permute.xlu0 %55
    %59 = vset.pattern.permute.xlu0 0
    %60 = vperm.xlu0 %59, %v18
    %v61 = vpop.permute.xlu0 %60
    %64 = vset.pattern.permute.xlu0 0
    %65 = vperm.xlu0 %64, %v19
    %v66 = vpop.permute.xlu0 %65
    %v72 = vunpack.c.l.b16 %v44
    %v73 = vunpack.c.l.b16 %v45
    %v74 = vunpack.c.l.b16 %v46
    %v75 = vunpack.c.l.b16 %v47
    %v76 = vpack.c.b16 %v73, %v72
    %v77 = vpack.c.b16 %v75, %v74
    %vm78 = vcmask 523264
    %v80 = vsel %vm78, %v76, 0
    %v83 = vsel %vm78, %v77, 0
    %v86 = vsel %vm78, %v36, 0
    %v89 = vsel %vm78, %v37, 0
    %v92 = vsel %vm78, %v38, 0
    %v95 = vsel %vm78, %v39, 0
    %v98 = vsel %vm78, %v40, 0
    %v101 = vsel %vm78, %v41, 0
    %v104 = vsel %vm78, %v42, 0
    %v107 = vsel %vm78, %v43, 0
    %109 = vmatprep.subr.bf16.mxu0 0
    %110 = vmatpush1.bf16.xpose.msra.mxu0 %v86
    %111 = vmatprep.subr.bf16.mxu0 0
    %112 = vmatpush1.bf16.xpose.msra.mxu0 %v89
    %113 = vmatprep.subr.bf16.mxu0 0
    %114 = vmatpush1.bf16.xpose.msra.mxu0 %v92
    %115 = vmatprep.subr.bf16.mxu0 0
    %116 = vmatpush1.bf16.xpose.msra.mxu0 %v95
    %117 = vmatprep.subr.bf16.mxu0 0
    %118 = vmatpush1.bf16.xpose.msra.mxu0 %v98
    %119 = vmatprep.subr.bf16.mxu0 0
    %120 = vmatpush1.bf16.xpose.msra.mxu0 %v101
    %121 = vmatprep.subr.bf16.mxu0 0
    %122 = vmatpush1.bf16.xpose.msra.mxu0 %v104
    %123 = vmatprep.subr.bf16.mxu0 0
    %124 = vmatpush1.bf16.xpose.msra.mxu0 %v107
    %125 = vmatprep.subr.bf16.mxu0 0
    %126 = vmatpush1.bf16.xpose.msra.mxu0 0
    %127 = vmatprep.subr.bf16.mxu0 0
    %128 = vmatpush1.bf16.xpose.msra.mxu0 0
    %129 = vmatprep.subr.bf16.mxu0 0
    %130 = vmatpush1.bf16.xpose.msra.mxu0 0
    %131 = vmatprep.subr.bf16.mxu0 0
    %132 = vmatpush1.bf16.xpose.msra.mxu0 0
    %133 = vmatprep.subr.bf16.mxu0 0
    %134 = vmatpush1.bf16.xpose.msra.mxu0 0
    %135 = vmatprep.subr.bf16.mxu0 0
    %136 = vmatpush1.bf16.xpose.msra.mxu0 0
    %137 = vmatprep.subr.bf16.mxu0 0
    %138 = vmatpush1.bf16.xpose.msra.mxu0 0
    %139 = vmatprep.subr.bf16.mxu0 0
    %140 = vmatpush1.bf16.xpose.msra.mxu0 0
    %141 = vmatprep.mubr.bf16.mxu0 0
    %142 = vmatmul.mubr.bf16.gmra.mrb[0].mxu0 %v80
    %v143 = vpop.f32.mrb[0].mxu0
    %v144 = vadd.f32 %v51, %v143
    %v145 = vpop.f32.mrb[0].mxu0
    %v146 = vpop.f32.mrb[0].mxu0
    %v147 = vadd.f32 %v56, %v146
    %v148 = vpop.f32.mrb[0].mxu0
    %149 = vmatprep.mubr.bf16.mxu0 0
    %150 = vmatmul.mubr.bf16.gmra.mrb[0].mxu0 %v83
    %v151 = vpop.f32.mrb[0].mxu0
    %v152 = vadd.f32 %v61, %v151
    %v153 = vpop.f32.mrb[0].mxu0
    %v154 = vpop.f32.mrb[0].mxu0
    %v155 = vadd.f32 %v66, %v154
    %v156 = vpop.f32.mrb[0].mxu0
    %157 = vdwg.mxu0
    %v158 = vadd.f32 %v144, %v147
    %v159 = vadd.f32 %v158, %v152
    %v160 = vadd.f32 %v159, %v155
    %v161 = vrot.slane %v160, 4
    %v162 = vadd.f32 %v160, %v161
    %v163 = vrot.slane %v162, 2
    %v164 = vadd.f32 %v162, %v163
    %v165 = vrot.slane %v164, 1
    %v166 = vadd.f32 %v164, %v165
    %v167 = vrcp.pop 32.0
    %v168 = vmul.f32 %v166, %v167
    %v169 = vsub.f32 %v144, %v168
    %v170 = vsub.f32 %v147, %v168
    %v171 = vsub.f32 %v152, %v168
    %v172 = vsub.f32 %v155, %v168
    %v173 = vmul.f32 %v169, %v169
    %v174 = vmul.f32 %v170, %v170
    %v175 = vmul.f32 %v171, %v171
    %v176 = vmul.f32 %v172, %v172
    %v177 = vadd.f32 %v173, %v174
    %v178 = vadd.f32 %v177, %v175
    %v179 = vadd.f32 %v178, %v176
    %v180 = vrot.slane %v179, 4
    %v181 = vadd.f32 %v179, %v180
    %v182 = vrot.slane %v181, 2
    %v183 = vadd.f32 %v181, %v182
    %v184 = vrot.slane %v183, 1
    %v185 = vadd.f32 %v183, %v184
    %v186 = vmul.f32 %v185, %v167
    %v187 = vadd.f32 %v186, 1e-05
    %v188 = vrsqrt.pop %v187
    %189 = vset.pattern.permute.xlu0 1
    %190 = vperm.xlu0 %189, %v16
    %v191 = vpop.permute.xlu0 %190
    %193 = vset.pattern.permute.xlu0 1
    %194 = vperm.xlu0 %193, %v17
    %v195 = vpop.permute.xlu0 %194
    %197 = vset.pattern.permute.xlu0 1
    %198 = vperm.xlu0 %197, %v18
    %v199 = vpop.permute.xlu0 %198
    %201 = vset.pattern.permute.xlu0 1
    %202 = vperm.xlu0 %201, %v19
    %v203 = vpop.permute.xlu0 %202
    %v205 = vmul.f32 %v191, %v188
    %v206 = vmul.f32 %v195, %v188
    %v207 = vmul.f32 %v199, %v188
    %v208 = vmul.f32 %v203, %v188
    %v209 = vmul.f32 %v169, %v205
    %v210 = vmul.f32 %v170, %v206
    %v211 = vmul.f32 %v171, %v207
    %v212 = vmul.f32 %v172, %v208
    %213 = vset.pattern.permute.xlu0 2
    %214 = vperm.xlu0 %213, %v16
    %v215 = vpop.permute.xlu0 %214
    %217 = vset.pattern.permute.xlu0 2
    %218 = vperm.xlu0 %217, %v17
    %v219 = vpop.permute.xlu0 %218
    %221 = vset.pattern.permute.xlu0 2
    %222 = vperm.xlu0 %221, %v18
    %v223 = vpop.permute.xlu0 %222
    %225 = vset.pattern.permute.xlu0 2
    %226 = vperm.xlu0 %225, %v19
    %v227 = vpop.permute.xlu0 %226
    %v229 = vadd.f32 %v209, %v215
    %v230 = vadd.f32 %v210, %v219
    %v231 = vadd.f32 %v211, %v223
    %v232 = vadd.f32 %v212, %v227
    %v233 = vmul.f32 %v229, 0.5
    %v234 = vmul.f32 %v230, 0.5
    %v235 = vmul.f32 %v231, 0.5
    %v236 = vmul.f32 %v232, 0.5
    %v237 = vmul.f32 %v229, 0.70710677
    %v238 = vmul.f32 %v230, 0.70710677
    %v239 = vmul.f32 %v231, 0.70710677
    %v240 = vmul.f32 %v232, 0.70710677
    %v241 = verf.f32.pop %v237
    %v242 = verf.f32.pop %v238
    %v243 = verf.f32.pop %v239
    %v244 = verf.f32.pop %v240
    %v245 = vadd.f32 %v241, 1.0
    %v246 = vadd.f32 %v242, 1.0
    %v247 = vadd.f32 %v243, 1.0
    %v248 = vadd.f32 %v244, 1.0
    %v249 = vmul.f32 %v233, %v245
    %v250 = vmul.f32 %v234, %v246
    %v251 = vmul.f32 %v235, %v247
    %v252 = vmul.f32 %v236, %v248
    %253 = vst [vmem:[#allocation2] sm:$0xff] %v249
    %254 = vst [vmem:[#allocation2 + $0x8] sm:$0xff] %v250
    %255 = vst [vmem:[#allocation2 + $0x10] sm:$0xff] %v251
    %256 = vst [vmem:[#allocation2 + $0x18] sm:$0xff] %v252
    // Predicated region
    $region14: #{tpu_custom_call.1} parent=1 // pred_check
      _
    $region15: #{tpu_custom_call.1} parent=1 // pred_check_branch
      %258 = sbr.rel (0) target = $region17
    $region16: #{tpu_custom_call.1} parent=1 // pred_region
      %s260 = ssub.s32 512, 512
      %261 = vsyncadd [#allocation3], %s260
      %s262 = sshll.u32 [#allocation2], 4
      %s263 = int_to_ptr.vmem [resolvable:$true] %s262
      %268 = dma.vmem_to_hbm [thread:$0]  %s263, 512, %s3, [#allocation3], 128, 128, 8
    $region17: #{tpu_custom_call.1} parent=1 // pred_fallthru
      _
    // Predicated region
    $region18: #{tpu_custom_call.1} parent=1 // pred_check
      _
    $region19: #{tpu_custom_call.1} parent=1 // pred_check_branch
      %270 = sbr.rel (0) target = $region21
    $region20: #{tpu_custom_call.1} parent=1 // pred_region
      %271 = dma.done [#allocation3], 512
    $region21: #{tpu_custom_call.1} parent=1 // pred_fallthru
      _
    %272 = vsyncpa [#allocation3], 1

</llo_original>
